<compile_context>
chip_gen: v5e
topology: v5e:2x2
jax: 0.10.0
libtpu: 0.0.40
codegen_flags: <defaults>
</compile_context>

<pallas_src>
import jax
import jax.numpy as jnp
from jax.experimental import pallas as pl
from jax.experimental.pallas import tpu as pltpu

n_state = 3
n_action = 2

# Column offsets of each layer inside the (8, 128) parameter slab.
# Rows 0..2 hold W stored as (in, out) (i.e. PyTorch W.T), row 3 holds the bias.
_L1_COL, _L2_COL, _L3_COL = 0, 4, 8


def dqn_kernel(x_ref, p_ref, o_ref):
    x = x_ref[...]  # (TB, n_state) f32

    def layer(h, col, n_in, n_out):
        # Bias row broadcasts over the batch (sublanes).
        acc = p_ref[3:4, col:col + n_out]                          # (1, n_out)
        for k in range(n_in):                                      # unrolled VPU FMAs
            acc = acc + h[:, k:k + 1] * p_ref[k:k + 1, col:col + n_out]
        return jnp.tanh(acc)                                       # EUP

    h1 = layer(x, _L1_COL, n_state, n_state)
    h2 = layer(h1, _L2_COL, n_state, n_state)
    # NOTE: the PyTorch spec really does apply tanh on the output layer too.
    q = layer(h2, _L3_COL, n_state, n_action)
    o_ref[...] = q.astype(o_ref.dtype)


def pack_params(params):
    """Pack (w1, b1, w2, b2, w3, b3) into a single (8, 128) f32 slab."""
    w1, b1, w2, b2, w3, b3 = params
    slab = jnp.zeros((8, 128), jnp.float32)
    slab = slab.at[0:n_state, _L1_COL:_L1_COL + n_state].set(w1)
    slab = slab.at[3, _L1_COL:_L1_COL + n_state].set(jnp.reshape(b1, (-1,)))
    slab = slab.at[0:n_state, _L2_COL:_L2_COL + n_state].set(w2)
    slab = slab.at[3, _L2_COL:_L2_COL + n_state].set(jnp.reshape(b2, (-1,)))
    slab = slab.at[0:n_state, _L3_COL:_L3_COL + n_action].set(w3)
    slab = slab.at[3, _L3_COL:_L3_COL + n_action].set(jnp.reshape(b3, (-1,)))
    return slab


def _dqn_call_single(x, slab):
    """No grid, no pipeline: whole problem lives in VMEM for one invocation."""
    B = x.shape[0]
    return pl.pallas_call(
        dqn_kernel,
        out_shape=jax.ShapeDtypeStruct((B, n_action), jnp.float32),
        in_specs=[
            pl.BlockSpec(memory_space=pltpu.MemorySpace.VMEM),
            pl.BlockSpec(memory_space=pltpu.MemorySpace.VMEM),
        ],
        out_specs=pl.BlockSpec(memory_space=pltpu.MemorySpace.VMEM),
    )(x, slab)


def _dqn_call_tiled(x, slab, batch_tile):
    """Large-batch path: parallel grid over batch, params VMEM-resident."""
    B = x.shape[0]
    return pl.pallas_call(
        dqn_kernel,
        out_shape=jax.ShapeDtypeStruct((B, n_action), jnp.float32),
        grid=(B // batch_tile,),
        in_specs=[
            pl.BlockSpec((batch_tile, n_state), lambda i: (i, 0)),
            pl.BlockSpec((8, 128), lambda i: (0, 0)),  # constant -> resident
        ],
        out_specs=pl.BlockSpec((batch_tile, n_action), lambda i: (i, 0)),
        compiler_params=pltpu.CompilerParams(
            dimension_semantics=("parallel",)),
    )(x, slab)


def dqn_forward(x, params, *, batch_tile=512):
    slab = pack_params(params)
    B = x.shape[0]
    if B >= batch_tile and B % batch_tile == 0:
        return _dqn_call_tiled(x, slab, batch_tile)
    return _dqn_call_single(x, slab)


def init_params(key):
    """Deterministic init mimicking PyTorch nn.Linear defaults:
    U(-1/sqrt(fan_in), 1/sqrt(fan_in)) for both weight and bias."""
    def linear(key, fan_in, fan_out):
        kw, kb = jax.random.split(key)
        bound = 1.0 / jnp.sqrt(jnp.float32(fan_in))
        # stored as (in, out) == W.T relative to PyTorch's (out, in)
        w = jax.random.uniform(kw, (fan_in, fan_out), jnp.float32, -bound, bound)
        b = jax.random.uniform(kb, (1, fan_out), jnp.float32, -bound, bound)
        return w, b

    k1, k2, k3 = jax.random.split(key, 3)
    w1, b1 = linear(k1, n_state, n_state)
    w2, b2 = linear(k2, n_state, n_state)
    w3, b3 = linear(k3, n_state, n_action)
    return (w1, b1, w2, b2, w3, b3)


def dqn_reference(x, params):
    w1, b1, w2, b2, w3, b3 = params
    h = jnp.tanh(x @ w1 + b1)
    h = jnp.tanh(h @ w2 + b2)
    return jnp.tanh(h @ w3 + b3)


if __name__ == "__main__":
    key = jax.random.PRNGKey(0)
    kx, kp, kx2 = jax.random.split(key, 3)

    params = init_params(kp)

    # Small batch: no-grid, single-VMEM-block path (typical DQN action selection).
    batch = 8
    x_small = jax.random.normal(kx, (batch, n_state), jnp.float32)
    out_small = jax.block_until_ready(dqn_forward(x_small, params))
    ref_small = dqn_reference(x_small, params)
    assert out_small.shape == (batch, n_action), out_small.shape
    assert jnp.allclose(out_small, ref_small, atol=1e-5, rtol=1e-5), (out_small, ref_small)

    # Larger batch: batch-tiled "parallel" grid path (replay-buffer evaluation).
    big_batch = 2048
    x_big = jax.random.normal(kx2, (big_batch, n_state), jnp.float32)
    out_big = jax.block_until_ready(dqn_forward(x_big, params))
    ref_big = dqn_reference(x_big, params)
    assert out_big.shape == (big_batch, n_action), out_big.shape
    assert jnp.allclose(out_big, ref_big, atol=1e-5, rtol=1e-5), (out_big, ref_big)

    print("KERNEL_OK")
</pallas_src>

<mosaic_0001>
module attributes {stable_mosaic.version = 11 : i64} {
  func.func @dqn_kernel(%arg0: memref<8x3xf32, #tpu.memory_space<vmem>>, %arg1: memref<8x128xf32, #tpu.memory_space<vmem>>, %arg2: memref<8x2xf32, #tpu.memory_space<vmem>>) attributes {dimension_semantics = [], scalar_prefetch = 0 : i64, scratch_operands = 0 : i64, tpu.core_type = #tpu.core_type<tc>} {
    %c0 = arith.constant 0 : index
    %c0_0 = arith.constant 0 : index
    %0 = vector.load %arg0[%c0, %c0_0] : memref<8x3xf32, #tpu.memory_space<vmem>>, vector<8x3xf32>
    %c3 = arith.constant 3 : index
    %c0_1 = arith.constant 0 : index
    %1 = vector.load %arg1[%c3, %c0_1] : memref<8x128xf32, #tpu.memory_space<vmem>>, vector<1x3xf32>
    %2 = vector.extract_strided_slice %0 {offsets = [0, 0], sizes = [8, 1], strides = [1, 1]} : vector<8x3xf32> to vector<8x1xf32>
    %c0_2 = arith.constant 0 : index
    %c0_3 = arith.constant 0 : index
    %3 = vector.load %arg1[%c0_2, %c0_3] : memref<8x128xf32, #tpu.memory_space<vmem>>, vector<1x3xf32>
    %4 = vector.broadcast %2 : vector<8x1xf32> to vector<8x3xf32>
    %5 = vector.broadcast %3 : vector<1x3xf32> to vector<8x3xf32>
    %6 = arith.mulf %4, %5 : vector<8x3xf32>
    %7 = vector.broadcast %1 : vector<1x3xf32> to vector<8x3xf32>
    %8 = arith.addf %7, %6 : vector<8x3xf32>
    %9 = vector.extract_strided_slice %0 {offsets = [0, 1], sizes = [8, 1], strides = [1, 1]} : vector<8x3xf32> to vector<8x1xf32>
    %c1 = arith.constant 1 : index
    %c0_4 = arith.constant 0 : index
    %10 = vector.load %arg1[%c1, %c0_4] : memref<8x128xf32, #tpu.memory_space<vmem>>, vector<1x3xf32>
    %11 = vector.broadcast %9 : vector<8x1xf32> to vector<8x3xf32>
    %12 = vector.broadcast %10 : vector<1x3xf32> to vector<8x3xf32>
    %13 = arith.mulf %11, %12 : vector<8x3xf32>
    %14 = arith.addf %8, %13 : vector<8x3xf32>
    %15 = vector.extract_strided_slice %0 {offsets = [0, 2], sizes = [8, 1], strides = [1, 1]} : vector<8x3xf32> to vector<8x1xf32>
    %c2 = arith.constant 2 : index
    %c0_5 = arith.constant 0 : index
    %16 = vector.load %arg1[%c2, %c0_5] : memref<8x128xf32, #tpu.memory_space<vmem>>, vector<1x3xf32>
    %17 = vector.broadcast %15 : vector<8x1xf32> to vector<8x3xf32>
    %18 = vector.broadcast %16 : vector<1x3xf32> to vector<8x3xf32>
    %19 = arith.mulf %17, %18 : vector<8x3xf32>
    %20 = arith.addf %14, %19 : vector<8x3xf32>
    %21 = math.tanh %20 : vector<8x3xf32>
    %c3_6 = arith.constant 3 : index
    %c4 = arith.constant 4 : index
    %22 = vector.load %arg1[%c3_6, %c4] : memref<8x128xf32, #tpu.memory_space<vmem>>, vector<1x3xf32>
    %23 = vector.extract_strided_slice %21 {offsets = [0, 0], sizes = [8, 1], strides = [1, 1]} : vector<8x3xf32> to vector<8x1xf32>
    %c0_7 = arith.constant 0 : index
    %c4_8 = arith.constant 4 : index
    %24 = vector.load %arg1[%c0_7, %c4_8] : memref<8x128xf32, #tpu.memory_space<vmem>>, vector<1x3xf32>
    %25 = vector.broadcast %23 : vector<8x1xf32> to vector<8x3xf32>
    %26 = vector.broadcast %24 : vector<1x3xf32> to vector<8x3xf32>
    %27 = arith.mulf %25, %26 : vector<8x3xf32>
    %28 = vector.broadcast %22 : vector<1x3xf32> to vector<8x3xf32>
    %29 = arith.addf %28, %27 : vector<8x3xf32>
    %30 = vector.extract_strided_slice %21 {offsets = [0, 1], sizes = [8, 1], strides = [1, 1]} : vector<8x3xf32> to vector<8x1xf32>
    %c1_9 = arith.constant 1 : index
    %c4_10 = arith.constant 4 : index
    %31 = vector.load %arg1[%c1_9, %c4_10] : memref<8x128xf32, #tpu.memory_space<vmem>>, vector<1x3xf32>
    %32 = vector.broadcast %30 : vector<8x1xf32> to vector<8x3xf32>
    %33 = vector.broadcast %31 : vector<1x3xf32> to vector<8x3xf32>
    %34 = arith.mulf %32, %33 : vector<8x3xf32>
    %35 = arith.addf %29, %34 : vector<8x3xf32>
    %36 = vector.extract_strided_slice %21 {offsets = [0, 2], sizes = [8, 1], strides = [1, 1]} : vector<8x3xf32> to vector<8x1xf32>
    %c2_11 = arith.constant 2 : index
    %c4_12 = arith.constant 4 : index
    %37 = vector.load %arg1[%c2_11, %c4_12] : memref<8x128xf32, #tpu.memory_space<vmem>>, vector<1x3xf32>
    %38 = vector.broadcast %36 : vector<8x1xf32> to vector<8x3xf32>
    %39 = vector.broadcast %37 : vector<1x3xf32> to vector<8x3xf32>
    %40 = arith.mulf %38, %39 : vector<8x3xf32>
    %41 = arith.addf %35, %40 : vector<8x3xf32>
    %42 = math.tanh %41 : vector<8x3xf32>
    %c3_13 = arith.constant 3 : index
    %c8 = arith.constant 8 : index
    %43 = vector.load %arg1[%c3_13, %c8] : memref<8x128xf32, #tpu.memory_space<vmem>>, vector<1x2xf32>
    %44 = vector.extract_strided_slice %42 {offsets = [0, 0], sizes = [8, 1], strides = [1, 1]} : vector<8x3xf32> to vector<8x1xf32>
    %c0_14 = arith.constant 0 : index
    %c8_15 = arith.constant 8 : index
    %45 = vector.load %arg1[%c0_14, %c8_15] : memref<8x128xf32, #tpu.memory_space<vmem>>, vector<1x2xf32>
    %46 = vector.broadcast %44 : vector<8x1xf32> to vector<8x2xf32>
    %47 = vector.broadcast %45 : vector<1x2xf32> to vector<8x2xf32>
    %48 = arith.mulf %46, %47 : vector<8x2xf32>
    %49 = vector.broadcast %43 : vector<1x2xf32> to vector<8x2xf32>
    %50 = arith.addf %49, %48 : vector<8x2xf32>
    %51 = vector.extract_strided_slice %42 {offsets = [0, 1], sizes = [8, 1], strides = [1, 1]} : vector<8x3xf32> to vector<8x1xf32>
    %c1_16 = arith.constant 1 : index
    %c8_17 = arith.constant 8 : index
    %52 = vector.load %arg1[%c1_16, %c8_17] : memref<8x128xf32, #tpu.memory_space<vmem>>, vector<1x2xf32>
    %53 = vector.broadcast %51 : vector<8x1xf32> to vector<8x2xf32>
    %54 = vector.broadcast %52 : vector<1x2xf32> to vector<8x2xf32>
    %55 = arith.mulf %53, %54 : vector<8x2xf32>
    %56 = arith.addf %50, %55 : vector<8x2xf32>
    %57 = vector.extract_strided_slice %42 {offsets = [0, 2], sizes = [8, 1], strides = [1, 1]} : vector<8x3xf32> to vector<8x1xf32>
    %c2_18 = arith.constant 2 : index
    %c8_19 = arith.constant 8 : index
    %58 = vector.load %arg1[%c2_18, %c8_19] : memref<8x128xf32, #tpu.memory_space<vmem>>, vector<1x2xf32>
    %59 = vector.broadcast %57 : vector<8x1xf32> to vector<8x2xf32>
    %60 = vector.broadcast %58 : vector<1x2xf32> to vector<8x2xf32>
    %61 = arith.mulf %59, %60 : vector<8x2xf32>
    %62 = arith.addf %56, %61 : vector<8x2xf32>
    %63 = math.tanh %62 : vector<8x2xf32>
    %c0_20 = arith.constant 0 : index
    %c0_21 = arith.constant 0 : index
    %64 = vector.load %arg2[%c0_20, %c0_21] : memref<8x2xf32, #tpu.memory_space<vmem>>, vector<8x2xf32>
    tpu.vector_store %arg2[%c0_20, %c0_21], %63 {strides = array<i32>} : memref<8x2xf32, #tpu.memory_space<vmem>>, vector<8x2xf32>,
    return
  }
}

</mosaic_0001>

<llo_original>
// kernel: tpu_custom_call.1
$region0: #{tpu_custom_call.1}
  #allocation0 [shape = 'u32[]', space=smem, size = 0x4, offset = 0x4, fixed_abs, tag = 'smem constant byte address 0x4 - core index']
  #allocation1 [shape = 'u32[72,128]{1,0:T(1,128)}', space=vmem, size = 0x9000, scoped, tag = 'internal scratch']
  %s0 = inlined_call_operand.vmem [shape: f32[8,3], index: 0, kind: input, shape index: {}]
  %s1 = inlined_call_operand.vmem [shape: f32[8,128], index: 1, kind: input, shape index: {}]
  %s2 = inlined_call_operand.vmem [shape: f32[8,2], index: 2, kind: output, shape index: {}]
  %s3 = sld [smem:[#allocation0]]
  $region18: #{tpu_custom_call.1} parent=0
    _
  %s5 = ssub.s32 1, %s3
  %s6 = scalar_select 0, %s5, %s3
  // Predicated region
  $region2: #{tpu_custom_call.1} parent=0 // pred_check
    _
  $region3: #{tpu_custom_call.1} parent=0 // pred_check_branch
    %8 = sbr.rel (0) target = $region5
  $region4: #{tpu_custom_call.1} parent=0 // pred_region
    _
  $region5: #{tpu_custom_call.1} parent=0 // pred_fallthru
    _
  // Predicated region
  $region6: #{tpu_custom_call.1} parent=0 // pred_check
    _
  $region7: #{tpu_custom_call.1} parent=0 // pred_check_branch
    %10 = sbr.rel (0) target = $region9
  $region8: #{tpu_custom_call.1} parent=0 // pred_region
    _
  $region9: #{tpu_custom_call.1} parent=0 // pred_fallthru
    _
  %v11 = vld [vmem:[%s0] sm:$0xff]
  %v12 = vld [vmem:[%s1 + $0x3] sm:$0x1]
  %v13 = vld [vmem:[%s1] sm:$0x1]
  %15 = vset.pattern.permute.xlu0 0
  %16 = vperm.xlu0 %15, %v11
  %v17 = vpop.permute.xlu0 %16
  %v19 = vperm.slane %v13, 0
  %v20 = vmul.f32 %v17, %v19
  %v21 = vperm.slane %v12, 0
  %v22 = vadd.f32 %v21, %v20
  %v23 = vld [vmem:[%s1 + $0x1] sm:$0x1]
  %24 = vset.pattern.permute.xlu0 1
  %25 = vperm.xlu0 %24, %v11
  %v26 = vpop.permute.xlu0 %25
  %v28 = vperm.slane %v23, 0
  %v29 = vmul.f32 %v26, %v28
  %v30 = vadd.f32 %v22, %v29
  %v31 = vld [vmem:[%s1 + $0x2] sm:$0x1]
  %32 = vset.pattern.permute.xlu0 2
  %33 = vperm.xlu0 %32, %v11
  %v34 = vpop.permute.xlu0 %33
  %v36 = vperm.slane %v31, 0
  %v37 = vmul.f32 %v34, %v36
  %v38 = vadd.f32 %v30, %v37
  %v39 = vtanh.pop %v38
  %41 = vset.pattern.permute.xlu0 0
  %42 = vperm.xlu0 %41, %v39
  %v43 = vpop.permute.xlu0 %42
  %v45 = vmul.f32 %v43, %v19
  %v46 = vadd.f32 %v21, %v45
  %47 = vset.pattern.permute.xlu0 1
  %48 = vperm.xlu0 %47, %v39
  %v49 = vpop.permute.xlu0 %48
  %v51 = vmul.f32 %v49, %v28
  %v52 = vadd.f32 %v46, %v51
  %53 = vset.pattern.permute.xlu0 2
  %54 = vperm.xlu0 %53, %v39
  %v55 = vpop.permute.xlu0 %54
  %v57 = vmul.f32 %v55, %v36
  %v58 = vadd.f32 %v52, %v57
  %v59 = vtanh.pop %v58
  %61 = vset.pattern.permute.xlu0 4
  %62 = vperm.xlu0 %61, %v59
  %v63 = vpop.permute.xlu0 %62
  %v65 = vmul.f32 %v63, %v19
  %v66 = vadd.f32 %v21, %v65
  %67 = vset.pattern.permute.xlu0 5
  %68 = vperm.xlu0 %67, %v59
  %v69 = vpop.permute.xlu0 %68
  %v71 = vmul.f32 %v69, %v28
  %v72 = vadd.f32 %v66, %v71
  %73 = vset.pattern.permute.xlu0 6
  %74 = vperm.xlu0 %73, %v59
  %v75 = vpop.permute.xlu0 %74
  %v77 = vmul.f32 %v75, %v36
  %v78 = vadd.f32 %v72, %v77
  %v79 = vtanh.pop %v78
  %81 = vrot.lane.b32.xlu0 %v79, 120
  %v82 = vpop.permute.xlu0 %81
  %vm84 = vcmask 15360
  %85 = vst.msk [vmem:[%s2] sm:$0xff] %vm84, %v82
  // Predicated region
  $region10: #{tpu_custom_call.1} parent=0 // pred_check
    _
  $region11: #{tpu_custom_call.1} parent=0 // pred_check_branch
    %87 = sbr.rel (0) target = $region13
  $region12: #{tpu_custom_call.1} parent=0 // pred_region
    _
  $region13: #{tpu_custom_call.1} parent=0 // pred_fallthru
    _
  // Predicated region
  $region14: #{tpu_custom_call.1} parent=0 // pred_check
    _
  $region15: #{tpu_custom_call.1} parent=0 // pred_check_branch
    %89 = sbr.rel (0) target = $region17
  $region16: #{tpu_custom_call.1} parent=0 // pred_region
    _
  $region17: #{tpu_custom_call.1} parent=0 // pred_fallthru
    _

</llo_original>
